<compile_context>
chip_gen: v5e
topology: v5e:2x2
jax: 0.10.0
libtpu: 0.0.40
codegen_flags: <defaults>
</compile_context>

<pallas_src>
import numpy as np
import jax
import jax.numpy as jnp
from jax.experimental import pallas as pl
from jax.experimental.pallas import tpu as pltpu

# ---- small shapes consistent with the module ----
B, S, E, H, R = 2, 8, 32, 4, 4          # batch, seq, embed, heads, rules
D = E // H                               # head_dim
SCALE = float(D) ** -0.5
N = B * S
SH = S // H                              # shuffled rows per head (torch transpose+view)
assert S % H == 0, "fused reshuffle matrices assume seq_len % num_heads == 0"


# ----------------------------------------------------------------------------
# Fused kernel: projections + fuzzy attention + rule sum + reshuffle + out_proj
# ----------------------------------------------------------------------------
def fuzzy_mha_kernel(xq_ref, xv_ref, wq_ref, bq_ref, wv_ref, bv_ref,
                     keys_ref, coef_ref, pool_ref, red_ref, sel_ref,
                     m1_ref, m2_ref, wo_ref, bo_ref, out_ref):
    # q replicated across rules (SCALE folded into Wq/bq in the wrapper)   (S, R*E)
    q = jnp.dot(xq_ref[...], wq_ref[...],
                preferred_element_type=jnp.float32) + bq_ref[...]
    # v in col = r*E + h*D + d layout (SCALE folded into Wv/bv)            (S, R*E)
    v = jnp.dot(xv_ref[...], wv_ref[...],
                preferred_element_type=jnp.float32) + bv_ref[...]

    # z[t,h,r] = mean_d(-0.5 * ((q - key) / width)^2).  coef = -0.5/(D*width^2)
    # folds the width division, the -0.5 and the 1/D mean; |.| is redundant once
    # squared.  pool has DxD all-ones blocks: per-(r,h) sum over d, re-broadcast
    # over d so everything stays a lane-dense (S, 128) slab.
    diff = q - keys_ref[...]
    root = coef_ref[...] * diff * diff                                     # (S, R*E)
    z = jnp.dot(root, pool_ref[...], preferred_element_type=jnp.float32)   # (S, R*E)

    # Softmax over rules: rule blocks are E lanes wide, so circular lane rolls by
    # r*E line every rule up with every other one (XLU slot, off the VPU path).
    m = z
    for r in range(1, R):
        m = jnp.maximum(m, pltpu.roll(z, shift=r * E, axis=1))
    e = jnp.exp(z - m)
    den = e
    for r in range(1, R):
        den = den + pltpu.roll(e, shift=r * E, axis=1)
    attn = e / den                                                         # (S, R*E)
    # dropout(p=0.0) is the identity -> skipped

    # Rule-weighted sum + torch transpose(1,2).view reshuffle + output projection,
    # expressed with constant 0/1 matrices (built in the wrapper):
    #   red : (R*E, H*E) sum over rules, replicate each head block over sub-blocks j
    #   m1  : (S,  H*E)  keep sub-block j == token % H
    #   sel : (S,  S)    gather the H tokens feeding each shuffled output row
    #   m2  : (S,  H*E)  keep head block h == row // (S//H)
    #   wo  : (H*E, E)   Wo tiled vertically
    ow = attn * v                                                          # (S, R*E)
    big = jnp.dot(ow, red_ref[...],
                  preferred_element_type=jnp.float32) * m1_ref[...]        # (S, H*E)
    wide = jnp.dot(sel_ref[...], big,
                   preferred_element_type=jnp.float32)                     # (S, H*E)
    out_ref[...] = (jnp.dot(wide * m2_ref[...], wo_ref[...],
                            preferred_element_type=jnp.float32)
                    + bo_ref[...])                                         # (S, E)


# ----------------------------------------------------------------------------
# Constant 0/1 matrices (pure layout bookkeeping, built once)
# ----------------------------------------------------------------------------
def build_constants():
    CR, CH = R * E, H * E            # rule-channel width (128) and head-block width (128)
    pool = np.zeros((CR, CR), np.float32)   # sum over d within each (r, h) block
    red = np.zeros((CR, CH), np.float32)    # sum over rules, replicate head block over j
    for r in range(R):
        for h in range(H):
            blk = slice(r * E + h * D, r * E + (h + 1) * D)
            pool[blk, blk] = 1.0
            for j in range(H):              # H == E // D sub-blocks per head block
                for d in range(D):
                    red[r * E + h * D + d, h * E + j * D + d] = 1.0

    # torch's output.transpose(1,2).contiguous().view(B, -1, E) maps
    #   shuffled[r, j*D + d] = out_nat[(r % SH)*H + j, (r // SH)*D + d]
    sel = np.zeros((S, S), np.float32)      # sel[r, s] = 1 iff s // H == r % SH
    m1 = np.zeros((S, CH), np.float32)      # m1[s, h*E + j*D + d] = 1 iff j == s % H
    m2 = np.zeros((S, CH), np.float32)      # m2[r, h*E + c]       = 1 iff h == r // SH
    for s in range(S):
        j = s % H
        for h in range(H):
            m1[s, h * E + j * D: h * E + (j + 1) * D] = 1.0
    for r in range(S):
        p, h_sel = r % SH, r // SH
        sel[r, p * H:(p + 1) * H] = 1.0
        m2[r, h_sel * E:(h_sel + 1) * E] = 1.0
    return tuple(jnp.asarray(a) for a in (pool, red, sel, m1, m2))


# ----------------------------------------------------------------------------
# Wrapper
# ----------------------------------------------------------------------------
def fuzzy_mha_forward(query, value, params, constants):
    Wq, bq, Wv, bv, Wo, bo, rules_keys, rules_widths = params
    pool, red, sel, m1, m2 = constants

    # ---- parameter plumbing (constant weight/rule rearrangement only) ----
    Wq_rep = jnp.tile(Wq * SCALE, (1, R))                      # (E, R*E), col = r*E + c
    bq_rep = jnp.tile(bq * SCALE, (R,)).reshape(1, R * E)

    # value_proj columns: torch order h*D*R + d*R + r -> kernel order r*E + h*D + d
    perm = np.empty(E * R, dtype=np.int32)
    for r in range(R):
        for h in range(H):
            for d in range(D):
                perm[r * E + h * D + d] = h * D * R + d * R + r
    Wv_perm = (Wv * SCALE)[:, perm]                            # (E, R*E)
    bv_perm = (bv * SCALE)[perm].reshape(1, R * E)

    keys_all = jnp.transpose(rules_keys, (1, 0, 2)).reshape(1, R * E)
    coef_all = (-0.5 / (D * jnp.square(jnp.transpose(rules_widths, (1, 0, 2))))
                ).reshape(1, R * E)

    Wo_stack = jnp.tile(Wo, (H, 1))                            # (H*E, E)
    bo2 = bo.reshape(1, E)

    xq2 = query.reshape(N, E)
    xv2 = value.reshape(N, E)

    token_tile = pl.BlockSpec((S, E), lambda i: (i, 0))

    def full(a):
        return pl.BlockSpec(a.shape, lambda i: (0, 0))

    out = pl.pallas_call(
        fuzzy_mha_kernel,
        out_shape=jax.ShapeDtypeStruct((N, E), jnp.float32),
        grid=(B,),
        in_specs=[token_tile, token_tile,
                  full(Wq_rep), full(bq_rep), full(Wv_perm), full(bv_perm),
                  full(keys_all), full(coef_all), full(pool), full(red),
                  full(sel), full(m1), full(m2), full(Wo_stack), full(bo2)],
        out_specs=pl.BlockSpec((S, E), lambda i: (i, 0)),
        compiler_params=pltpu.CompilerParams(dimension_semantics=("parallel",)),
    )(xq2, xv2, Wq_rep, bq_rep, Wv_perm, bv_perm, keys_all, coef_all,
      pool, red, sel, m1, m2, Wo_stack, bo2)

    return out.reshape(B, S, E)


# ----------------------------------------------------------------------------
# Pure-JAX reference (mirrors the PyTorch forward exactly)
# ----------------------------------------------------------------------------
def reference(query, value, params):
    Wq, bq, Wv, bv, Wo, bo, keys, widths = params
    q = (query @ Wq + bq) * SCALE                               # (B,S,E)
    q = q.reshape(B, S, H, D).transpose(0, 2, 1, 3)             # (B,H,S,D)
    key = keys[None, :, None, :, :]                             # (1,H,1,R,D)
    dist = jnp.abs(q[:, :, :, None, :] - key)                   # (B,H,S,R,D)
    prot = jnp.transpose(dist, (0, 2, 1, 3, 4)) / widths[None, None]   # (B,S,H,R,D)
    z = jnp.mean(-0.5 * prot * prot, axis=-1)                   # (B,S,H,R)
    attn = jax.nn.softmax(z, axis=-1)
    v = (value @ Wv + bv) * SCALE                               # (B,S,E*R)
    v = v.reshape(B, S, H, D, R).transpose(0, 2, 1, 3, 4)       # (B,H,S,D,R)
    v = jnp.transpose(v, (0, 2, 1, 4, 3))                       # (B,S,H,R,D)
    out = jnp.sum(attn[..., None] * v, axis=-2)                 # (B,S,H,D)
    out = jnp.transpose(out, (0, 2, 1, 3)).reshape(B, S, H * D)  # torch transpose+view
    return out @ Wo + bo


# ----------------------------------------------------------------------------
if __name__ == "__main__":
    key0 = jax.random.PRNGKey(0)
    ks = jax.random.split(key0, 10)

    # deterministic parameter init (num_rules != 2 -> plain N(0, 0.02) for keys)
    Wq = 0.1 * jax.random.normal(ks[0], (E, E), jnp.float32)
    bq = 0.1 * jax.random.normal(ks[1], (E,), jnp.float32)
    Wv = 0.1 * jax.random.normal(ks[2], (E, E * R), jnp.float32)
    bv = 0.1 * jax.random.normal(ks[3], (E * R,), jnp.float32)
    Wo = 0.1 * jax.random.normal(ks[4], (E, E), jnp.float32)
    bo = 0.1 * jax.random.normal(ks[5], (E,), jnp.float32)
    rules_keys = 0.02 * jax.random.normal(ks[6], (H, R, D), jnp.float32)
    rules_widths = jnp.ones((H, R, D), jnp.float32)
    params = (Wq, bq, Wv, bv, Wo, bo, rules_keys, rules_widths)

    query = jax.random.normal(ks[7], (B, S, E), jnp.float32)
    value = jax.random.normal(ks[8], (B, S, E), jnp.float32)
    # (the module's `key` argument is unused in forward)

    constants = build_constants()
    fwd = jax.jit(fuzzy_mha_forward)
    out = jax.block_until_ready(fwd(query, value, params, constants))

    ref = reference(query, value, params)
    np.testing.assert_allclose(np.asarray(out), np.asarray(ref), rtol=1e-5, atol=1e-5)

    # TODO(synk): dropout is identity at p=0.0; nonzero dropout would need pltpu PRNG.
    print("KERNEL_OK")
</pallas_src>

<mosaic_0001>
module attributes {stable_mosaic.version = 11 : i64} {
  func.func @fuzzy_mha_kernel(%arg0: i32, %arg1: memref<8x32xf32, #tpu.memory_space<vmem>>, %arg2: memref<8x32xf32, #tpu.memory_space<vmem>>, %arg3: memref<32x128xf32, #tpu.memory_space<vmem>>, %arg4: memref<1x128xf32, #tpu.memory_space<vmem>>, %arg5: memref<32x128xf32, #tpu.memory_space<vmem>>, %arg6: memref<1x128xf32, #tpu.memory_space<vmem>>, %arg7: memref<1x128xf32, #tpu.memory_space<vmem>>, %arg8: memref<1x128xf32, #tpu.memory_space<vmem>>, %arg9: memref<128x128xf32, #tpu.memory_space<vmem>>, %arg10: memref<128x128xf32, #tpu.memory_space<vmem>>, %arg11: memref<8x8xf32, #tpu.memory_space<vmem>>, %arg12: memref<8x128xf32, #tpu.memory_space<vmem>>, %arg13: memref<8x128xf32, #tpu.memory_space<vmem>>, %arg14: memref<128x32xf32, #tpu.memory_space<vmem>>, %arg15: memref<1x32xf32, #tpu.memory_space<vmem>>, %arg16: memref<8x32xf32, #tpu.memory_space<vmem>>) attributes {dimension_semantics = [#tpu.dimension_semantics<parallel>], iteration_bounds = array<i64: 2>, scalar_prefetch = 0 : i64, scratch_operands = 0 : i64, tpu.core_type = #tpu.core_type<tc>, window_params = [{transform_indices = @transform_0, window_bounds = array<i64: 8, 32>}, {transform_indices = @transform_1, window_bounds = array<i64: 8, 32>}, {pipeline_mode = #tpu.pipeline_mode<synchronous>, transform_indices = @transform_2, window_bounds = array<i64: 32, 128>}, {pipeline_mode = #tpu.pipeline_mode<synchronous>, transform_indices = @transform_3, window_bounds = array<i64: 1, 128>}, {pipeline_mode = #tpu.pipeline_mode<synchronous>, transform_indices = @transform_4, window_bounds = array<i64: 32, 128>}, {pipeline_mode = #tpu.pipeline_mode<synchronous>, transform_indices = @transform_5, window_bounds = array<i64: 1, 128>}, {pipeline_mode = #tpu.pipeline_mode<synchronous>, transform_indices = @transform_6, window_bounds = array<i64: 1, 128>}, {pipeline_mode = #tpu.pipeline_mode<synchronous>, transform_indices = @transform_7, window_bounds = array<i64: 1, 128>}, {pipeline_mode = #tpu.pipeline_mode<synchronous>, transform_indices = @transform_8, window_bounds = array<i64: 128, 128>}, {pipeline_mode = #tpu.pipeline_mode<synchronous>, transform_indices = @transform_9, window_bounds = array<i64: 128, 128>}, {pipeline_mode = #tpu.pipeline_mode<synchronous>, transform_indices = @transform_10, window_bounds = array<i64: 8, 8>}, {pipeline_mode = #tpu.pipeline_mode<synchronous>, transform_indices = @transform_11, window_bounds = array<i64: 8, 128>}, {pipeline_mode = #tpu.pipeline_mode<synchronous>, transform_indices = @transform_12, window_bounds = array<i64: 8, 128>}, {pipeline_mode = #tpu.pipeline_mode<synchronous>, transform_indices = @transform_13, window_bounds = array<i64: 128, 32>}, {pipeline_mode = #tpu.pipeline_mode<synchronous>, transform_indices = @transform_14, window_bounds = array<i64: 1, 32>}, {transform_indices = @transform_15, window_bounds = array<i64: 8, 32>}]} {
    %c0 = arith.constant 0 : index
    %c0_0 = arith.constant 0 : index
    %0 = vector.load %arg1[%c0, %c0_0] : memref<8x32xf32, #tpu.memory_space<vmem>>, vector<8x32xf32>
    %c0_1 = arith.constant 0 : index
    %c0_2 = arith.constant 0 : index
    %1 = vector.load %arg3[%c0_1, %c0_2] : memref<32x128xf32, #tpu.memory_space<vmem>>, vector<32x128xf32>
    %cst = arith.constant dense<0.000000e+00> : vector<8x128xf32>
    %2 = tpu.matmul %0, %1, %cst {dimension_numbers = #tpu.dot_dimension_numbers<[1], [0], [0], [1], [0, 0, 1, 1], [], []>} : vector<8x32xf32>, vector<32x128xf32>, vector<8x128xf32> -> vector<8x128xf32>
    %c0_3 = arith.constant 0 : index
    %c0_4 = arith.constant 0 : index
    %3 = vector.load %arg4[%c0_3, %c0_4] : memref<1x128xf32, #tpu.memory_space<vmem>>, vector<1x128xf32>
    %4 = vector.broadcast %3 : vector<1x128xf32> to vector<8x128xf32>
    %5 = arith.addf %2, %4 : vector<8x128xf32>
    %c0_5 = arith.constant 0 : index
    %c0_6 = arith.constant 0 : index
    %6 = vector.load %arg2[%c0_5, %c0_6] : memref<8x32xf32, #tpu.memory_space<vmem>>, vector<8x32xf32>
    %c0_7 = arith.constant 0 : index
    %c0_8 = arith.constant 0 : index
    %7 = vector.load %arg5[%c0_7, %c0_8] : memref<32x128xf32, #tpu.memory_space<vmem>>, vector<32x128xf32>
    %cst_9 = arith.constant dense<0.000000e+00> : vector<8x128xf32>
    %8 = tpu.matmul %6, %7, %cst_9 {dimension_numbers = #tpu.dot_dimension_numbers<[1], [0], [0], [1], [0, 0, 1, 1], [], []>} : vector<8x32xf32>, vector<32x128xf32>, vector<8x128xf32> -> vector<8x128xf32>
    %c0_10 = arith.constant 0 : index
    %c0_11 = arith.constant 0 : index
    %9 = vector.load %arg6[%c0_10, %c0_11] : memref<1x128xf32, #tpu.memory_space<vmem>>, vector<1x128xf32>
    %10 = vector.broadcast %9 : vector<1x128xf32> to vector<8x128xf32>
    %11 = arith.addf %8, %10 : vector<8x128xf32>
    %c0_12 = arith.constant 0 : index
    %c0_13 = arith.constant 0 : index
    %12 = vector.load %arg7[%c0_12, %c0_13] : memref<1x128xf32, #tpu.memory_space<vmem>>, vector<1x128xf32>
    %13 = vector.broadcast %12 : vector<1x128xf32> to vector<8x128xf32>
    %14 = arith.subf %5, %13 : vector<8x128xf32>
    %c0_14 = arith.constant 0 : index
    %c0_15 = arith.constant 0 : index
    %15 = vector.load %arg8[%c0_14, %c0_15] : memref<1x128xf32, #tpu.memory_space<vmem>>, vector<1x128xf32>
    %16 = vector.broadcast %15 : vector<1x128xf32> to vector<8x128xf32>
    %17 = arith.mulf %16, %14 : vector<8x128xf32>
    %18 = arith.mulf %17, %14 : vector<8x128xf32>
    %c0_16 = arith.constant 0 : index
    %c0_17 = arith.constant 0 : index
    %19 = vector.load %arg9[%c0_16, %c0_17] : memref<128x128xf32, #tpu.memory_space<vmem>>, vector<128x128xf32>
    %cst_18 = arith.constant dense<0.000000e+00> : vector<8x128xf32>
    %20 = tpu.matmul %18, %19, %cst_18 {dimension_numbers = #tpu.dot_dimension_numbers<[1], [0], [0], [1], [0, 0, 1, 1], [], []>} : vector<8x128xf32>, vector<128x128xf32>, vector<8x128xf32> -> vector<8x128xf32>
    %c32_i32 = arith.constant 32 : i32
    %21 = tpu.dynamic_rotate %20 by %c32_i32 dim 1 : vector<8x128xf32>, i32 -> vector<8x128xf32>
    %22 = arith.maximumf %20, %21 : vector<8x128xf32>
    %c64_i32 = arith.constant 64 : i32
    %23 = tpu.dynamic_rotate %20 by %c64_i32 dim 1 : vector<8x128xf32>, i32 -> vector<8x128xf32>
    %24 = arith.maximumf %22, %23 : vector<8x128xf32>
    %c96_i32 = arith.constant 96 : i32
    %25 = tpu.dynamic_rotate %20 by %c96_i32 dim 1 : vector<8x128xf32>, i32 -> vector<8x128xf32>
    %26 = arith.maximumf %24, %25 : vector<8x128xf32>
    %27 = arith.subf %20, %26 : vector<8x128xf32>
    %28 = math.exp %27 : vector<8x128xf32>
    %c32_i32_19 = arith.constant 32 : i32
    %29 = tpu.dynamic_rotate %28 by %c32_i32_19 dim 1 : vector<8x128xf32>, i32 -> vector<8x128xf32>
    %30 = arith.addf %28, %29 : vector<8x128xf32>
    %c64_i32_20 = arith.constant 64 : i32
    %31 = tpu.dynamic_rotate %28 by %c64_i32_20 dim 1 : vector<8x128xf32>, i32 -> vector<8x128xf32>
    %32 = arith.addf %30, %31 : vector<8x128xf32>
    %c96_i32_21 = arith.constant 96 : i32
    %33 = tpu.dynamic_rotate %28 by %c96_i32_21 dim 1 : vector<8x128xf32>, i32 -> vector<8x128xf32>
    %34 = arith.addf %32, %33 : vector<8x128xf32>
    %35 = arith.divf %28, %34 : vector<8x128xf32>
    %36 = arith.mulf %35, %11 : vector<8x128xf32>
    %c0_22 = arith.constant 0 : index
    %c0_23 = arith.constant 0 : index
    %37 = vector.load %arg10[%c0_22, %c0_23] : memref<128x128xf32, #tpu.memory_space<vmem>>, vector<128x128xf32>
    %cst_24 = arith.constant dense<0.000000e+00> : vector<8x128xf32>
    %38 = tpu.matmul %36, %37, %cst_24 {dimension_numbers = #tpu.dot_dimension_numbers<[1], [0], [0], [1], [0, 0, 1, 1], [], []>} : vector<8x128xf32>, vector<128x128xf32>, vector<8x128xf32> -> vector<8x128xf32>
    %c0_25 = arith.constant 0 : index
    %c0_26 = arith.constant 0 : index
    %39 = vector.load %arg12[%c0_25, %c0_26] : memref<8x128xf32, #tpu.memory_space<vmem>>, vector<8x128xf32>
    %40 = arith.mulf %38, %39 : vector<8x128xf32>
    %c0_27 = arith.constant 0 : index
    %c0_28 = arith.constant 0 : index
    %41 = vector.load %arg11[%c0_27, %c0_28] : memref<8x8xf32, #tpu.memory_space<vmem>>, vector<8x8xf32>
    %cst_29 = arith.constant dense<0.000000e+00> : vector<8x128xf32>
    %42 = tpu.matmul %41, %40, %cst_29 {dimension_numbers = #tpu.dot_dimension_numbers<[1], [0], [0], [1], [0, 0, 1, 1], [], []>} : vector<8x8xf32>, vector<8x128xf32>, vector<8x128xf32> -> vector<8x128xf32>
    %c0_30 = arith.constant 0 : index
    %c0_31 = arith.constant 0 : index
    %43 = vector.load %arg13[%c0_30, %c0_31] : memref<8x128xf32, #tpu.memory_space<vmem>>, vector<8x128xf32>
    %44 = arith.mulf %42, %43 : vector<8x128xf32>
    %c0_32 = arith.constant 0 : index
    %c0_33 = arith.constant 0 : index
    %45 = vector.load %arg14[%c0_32, %c0_33] : memref<128x32xf32, #tpu.memory_space<vmem>>, vector<128x32xf32>
    %cst_34 = arith.constant dense<0.000000e+00> : vector<8x32xf32>
    %46 = tpu.matmul %44, %45, %cst_34 {dimension_numbers = #tpu.dot_dimension_numbers<[1], [0], [0], [1], [0, 0, 1, 1], [], []>} : vector<8x128xf32>, vector<128x32xf32>, vector<8x32xf32> -> vector<8x32xf32>
    %c0_35 = arith.constant 0 : index
    %c0_36 = arith.constant 0 : index
    %47 = vector.load %arg15[%c0_35, %c0_36] : memref<1x32xf32, #tpu.memory_space<vmem>>, vector<1x32xf32>
    %48 = vector.broadcast %47 : vector<1x32xf32> to vector<8x32xf32>
    %49 = arith.addf %46, %48 : vector<8x32xf32>
    %c0_37 = arith.constant 0 : index
    %c0_38 = arith.constant 0 : index
    %50 = vector.load %arg16[%c0_37, %c0_38] : memref<8x32xf32, #tpu.memory_space<vmem>>, vector<8x32xf32>
    tpu.vector_store %arg16[%c0_37, %c0_38], %49 {strides = array<i32>} : memref<8x32xf32, #tpu.memory_space<vmem>>, vector<8x32xf32>,
    return
  }
  func.func @transform_0(%arg0: i32) -> (i32, i32) {
    %c0_i32 = arith.constant 0 : i32
    %c0_i32_0 = arith.constant 0 : i32
    return %arg0, %c0_i32 : i32, i32
  }
  func.func @transform_1(%arg0: i32) -> (i32, i32) {
    %c0_i32 = arith.constant 0 : i32
    %c0_i32_0 = arith.constant 0 : i32
    return %arg0, %c0_i32 : i32, i32
  }
  func.func @transform_2(%arg0: i32) -> (i32, i32) {
    %c0_i32 = arith.constant 0 : i32
    %c0_i32_0 = arith.constant 0 : i32
    %c0_i32_1 = arith.constant 0 : i32
    return %c0_i32, %c0_i32_0 : i32, i32
  }
  func.func @transform_3(%arg0: i32) -> (i32, i32) {
    %c0_i32 = arith.constant 0 : i32
    %c0_i32_0 = arith.constant 0 : i32
    %c0_i32_1 = arith.constant 0 : i32
    return %c0_i32, %c0_i32_0 : i32, i32
  }
  func.func @transform_4(%arg0: i32) -> (i32, i32) {
    %c0_i32 = arith.constant 0 : i32
    %c0_i32_0 = arith.constant 0 : i32
    %c0_i32_1 = arith.constant 0 : i32
    return %c0_i32, %c0_i32_0 : i32, i32
  }
  func.func @transform_5(%arg0: i32) -> (i32, i32) {
    %c0_i32 = arith.constant 0 : i32
    %c0_i32_0 = arith.constant 0 : i32
    %c0_i32_1 = arith.constant 0 : i32
    return %c0_i32, %c0_i32_0 : i32, i32
  }
  func.func @transform_6(%arg0: i32) -> (i32, i32) {
    %c0_i32 = arith.constant 0 : i32
    %c0_i32_0 = arith.constant 0 : i32
    %c0_i32_1 = arith.constant 0 : i32
    return %c0_i32, %c0_i32_0 : i32, i32
  }
  func.func @transform_7(%arg0: i32) -> (i32, i32) {
    %c0_i32 = arith.constant 0 : i32
    %c0_i32_0 = arith.constant 0 : i32
    %c0_i32_1 = arith.constant 0 : i32
    return %c0_i32, %c0_i32_0 : i32, i32
  }
  func.func @transform_8(%arg0: i32) -> (i32, i32) {
    %c0_i32 = arith.constant 0 : i32
    %c0_i32_0 = arith.constant 0 : i32
    %c0_i32_1 = arith.constant 0 : i32
    return %c0_i32, %c0_i32_0 : i32, i32
  }
  func.func @transform_9(%arg0: i32) -> (i32, i32) {
    %c0_i32 = arith.constant 0 : i32
    %c0_i32_0 = arith.constant 0 : i32
    %c0_i32_1 = arith.constant 0 : i32
    return %c0_i32, %c0_i32_0 : i32, i32
  }
  func.func @transform_10(%arg0: i32) -> (i32, i32) {
    %c0_i32 = arith.constant 0 : i32
    %c0_i32_0 = arith.constant 0 : i32
    %c0_i32_1 = arith.constant 0 : i32
    return %c0_i32, %c0_i32_0 : i32, i32
  }
  func.func @transform_11(%arg0: i32) -> (i32, i32) {
    %c0_i32 = arith.constant 0 : i32
    %c0_i32_0 = arith.constant 0 : i32
    %c0_i32_1 = arith.constant 0 : i32
    return %c0_i32, %c0_i32_0 : i32, i32
  }
  func.func @transform_12(%arg0: i32) -> (i32, i32) {
    %c0_i32 = arith.constant 0 : i32
    %c0_i32_0 = arith.constant 0 : i32
    %c0_i32_1 = arith.constant 0 : i32
    return %c0_i32, %c0_i32_0 : i32, i32
  }
  func.func @transform_13(%arg0: i32) -> (i32, i32) {
    %c0_i32 = arith.constant 0 : i32
    %c0_i32_0 = arith.constant 0 : i32
    %c0_i32_1 = arith.constant 0 : i32
    return %c0_i32, %c0_i32_0 : i32, i32
  }
  func.func @transform_14(%arg0: i32) -> (i32, i32) {
    %c0_i32 = arith.constant 0 : i32
    %c0_i32_0 = arith.constant 0 : i32
    %c0_i32_1 = arith.constant 0 : i32
    return %c0_i32, %c0_i32_0 : i32, i32
  }
  func.func @transform_15(%arg0: i32) -> (i32, i32) {
    %c0_i32 = arith.constant 0 : i32
    %c0_i32_0 = arith.constant 0 : i32
    return %arg0, %c0_i32 : i32, i32
  }
}

</mosaic_0001>

<llo_original>
// kernel: tile.19
$region0: #{tile.19}
  %s0 = inlined_call_operand.vmem [shape: f32[32,4,32], index: 0, kind: input, shape index: {}]
  %s1 = inlined_call_operand.vmem [shape: f32[32,128], index: 1, kind: output, shape index: {}]
  $region1: #{tile.19} parent=0
    #allocation0 [shape = 'u8[131072]{0}', space=vmem, size = 0x20000, scoped, tag = 'scoped mem for input reshape']
    %s3 = ssub.s32 16, 1
    %s4 = scalar_lea.vmem %s0, 124
    %v5 = vld [vmem:[%s4] sm:%s3]
    %s6 = scalar_lea.vmem [#allocation0], 248
    %7 = vst [vmem:[%s6] sm:%s3] %v5
    %s8 = scalar_lea.vmem %s0, 120
    %v9 = vld [vmem:[%s8] sm:%s3]
    %s10 = scalar_lea.vmem [#allocation0], 240
    %11 = vst [vmem:[%s10] sm:%s3] %v9
    %s12 = scalar_lea.vmem %s0, 116
    %v13 = vld [vmem:[%s12] sm:%s3]
    %s14 = scalar_lea.vmem [#allocation0], 232
    %15 = vst [vmem:[%s14] sm:%s3] %v13
    %s16 = scalar_lea.vmem %s0, 112
    %v17 = vld [vmem:[%s16] sm:%s3]
    %s18 = scalar_lea.vmem [#allocation0], 224
    %19 = vst [vmem:[%s18] sm:%s3] %v17
    %s20 = scalar_lea.vmem %s0, 108
    %v21 = vld [vmem:[%s20] sm:%s3]
    %s22 = scalar_lea.vmem [#allocation0], 216
    %23 = vst [vmem:[%s22] sm:%s3] %v21
    %s24 = scalar_lea.vmem %s0, 104
    %v25 = vld [vmem:[%s24] sm:%s3]
    %s26 = scalar_lea.vmem [#allocation0], 208
    %27 = vst [vmem:[%s26] sm:%s3] %v25
    %s28 = scalar_lea.vmem %s0, 100
    %v29 = vld [vmem:[%s28] sm:%s3]
    %s30 = scalar_lea.vmem [#allocation0], 200
    %31 = vst [vmem:[%s30] sm:%s3] %v29
    %s32 = scalar_lea.vmem %s0, 96
    %v33 = vld [vmem:[%s32] sm:%s3]
    %s34 = scalar_lea.vmem [#allocation0], 192
    %35 = vst [vmem:[%s34] sm:%s3] %v33
    %s36 = scalar_lea.vmem %s0, 92
    %v37 = vld [vmem:[%s36] sm:%s3]
    %s38 = scalar_lea.vmem [#allocation0], 184
    %39 = vst [vmem:[%s38] sm:%s3] %v37
    %s40 = scalar_lea.vmem %s0, 88
    %v41 = vld [vmem:[%s40] sm:%s3]
    %s42 = scalar_lea.vmem [#allocation0], 176
    %43 = vst [vmem:[%s42] sm:%s3] %v41
    %s44 = scalar_lea.vmem %s0, 84
    %v45 = vld [vmem:[%s44] sm:%s3]
    %s46 = scalar_lea.vmem [#allocation0], 168
    %47 = vst [vmem:[%s46] sm:%s3] %v45
    %s48 = scalar_lea.vmem %s0, 80
    %v49 = vld [vmem:[%s48] sm:%s3]
    %s50 = scalar_lea.vmem [#allocation0], 160
    %51 = vst [vmem:[%s50] sm:%s3] %v49
    %s52 = scalar_lea.vmem %s0, 76
    %v53 = vld [vmem:[%s52] sm:%s3]
    %s54 = scalar_lea.vmem [#allocation0], 152
    %55 = vst [vmem:[%s54] sm:%s3] %v53
    %s56 = scalar_lea.vmem %s0, 72
    %v57 = vld [vmem:[%s56] sm:%s3]
    %s58 = scalar_lea.vmem [#allocation0], 144
    %59 = vst [vmem:[%s58] sm:%s3] %v57
    %s60 = scalar_lea.vmem %s0, 68
    %v61 = vld [vmem:[%s60] sm:%s3]
    %s62 = scalar_lea.vmem [#allocation0], 136
    %63 = vst [vmem:[%s62] sm:%s3] %v61
    %s64 = scalar_lea.vmem %s0, 64
    %v65 = vld [vmem:[%s64] sm:%s3]
    %s66 = scalar_lea.vmem [#allocation0], 128
    %67 = vst [vmem:[%s66] sm:%s3] %v65
    %s68 = scalar_lea.vmem %s0, 60
    %v69 = vld [vmem:[%s68] sm:%s3]
    %s70 = scalar_lea.vmem [#allocation0], 120
    %71 = vst [vmem:[%s70] sm:%s3] %v69
    %s72 = scalar_lea.vmem %s0, 56
    %v73 = vld [vmem:[%s72] sm:%s3]
    %s74 = scalar_lea.vmem [#allocation0], 112
    %75 = vst [vmem:[%s74] sm:%s3] %v73
    %s76 = scalar_lea.vmem %s0, 52
    %v77 = vld [vmem:[%s76] sm:%s3]
    %s78 = scalar_lea.vmem [#allocation0], 104
    %79 = vst [vmem:[%s78] sm:%s3] %v77
    %s80 = scalar_lea.vmem %s0, 48
    %v81 = vld [vmem:[%s80] sm:%s3]
    %s82 = scalar_lea.vmem [#allocation0], 96
    %83 = vst [vmem:[%s82] sm:%s3] %v81
    %s84 = scalar_lea.vmem %s0, 44
    %v85 = vld [vmem:[%s84] sm:%s3]
    %s86 = scalar_lea.vmem [#allocation0], 88
    %87 = vst [vmem:[%s86] sm:%s3] %v85
    %s88 = scalar_lea.vmem %s0, 40
    %v89 = vld [vmem:[%s88] sm:%s3]
    %s90 = scalar_lea.vmem [#allocation0], 80
    %91 = vst [vmem:[%s90] sm:%s3] %v89
    %s92 = scalar_lea.vmem %s0, 36
    %v93 = vld [vmem:[%s92] sm:%s3]
    %s94 = scalar_lea.vmem [#allocation0], 72
    %95 = vst [vmem:[%s94] sm:%s3] %v93
    %s96 = scalar_lea.vmem %s0, 32
    %v97 = vld [vmem:[%s96] sm:%s3]
    %s98 = scalar_lea.vmem [#allocation0], 64
    %99 = vst [vmem:[%s98] sm:%s3] %v97
    %s100 = scalar_lea.vmem %s0, 28
    %v101 = vld [vmem:[%s100] sm:%s3]
    %s102 = scalar_lea.vmem [#allocation0], 56
    %103 = vst [vmem:[%s102] sm:%s3] %v101
    %s104 = scalar_lea.vmem %s0, 24
    %v105 = vld [vmem:[%s104] sm:%s3]
    %s106 = scalar_lea.vmem [#allocation0], 48
    %107 = vst [vmem:[%s106] sm:%s3] %v105
    %s108 = scalar_lea.vmem %s0, 20
    %v109 = vld [vmem:[%s108] sm:%s3]
    %s110 = scalar_lea.vmem [#allocation0], 40
    %111 = vst [vmem:[%s110] sm:%s3] %v109
    %s112 = scalar_lea.vmem %s0, 16
    %v113 = vld [vmem:[%s112] sm:%s3]
    %s114 = scalar_lea.vmem [#allocation0], 32
    %115 = vst [vmem:[%s114] sm:%s3] %v113
    %s116 = scalar_lea.vmem %s0, 12
    %v117 = vld [vmem:[%s116] sm:%s3]
    %s118 = scalar_lea.vmem [#allocation0], 24
    %119 = vst [vmem:[%s118] sm:%s3] %v117
    %s120 = scalar_lea.vmem %s0, 8
    %v121 = vld [vmem:[%s120] sm:%s3]
    %s122 = scalar_lea.vmem [#allocation0], 16
    %123 = vst [vmem:[%s122] sm:%s3] %v121
    %s124 = scalar_lea.vmem %s0, 4
    %v125 = vld [vmem:[%s124] sm:%s3]
    %s126 = scalar_lea.vmem [#allocation0], 8
    %127 = vst [vmem:[%s126] sm:%s3] %v125
    %v128 = vld [vmem:[%s0] sm:%s3]
    %129 = vst [vmem:[#allocation0] sm:%s3] %v128
    %v130 = vld [vmem:[#allocation0] ss:$8 sm:$0xf]
    %v131 = vld [vmem:[#allocation0] ss:$8 sm:$0xf0]
    %vm132 = vcmask 1047556
    %v133 = vsel %vm132, %v131, %v130
    %vm134 = vcmask 261120
    %135 = vst.msk [vmem:[%s1] sm:$0xff] %vm134, %v133
    %s136 = scalar_lea.vmem [#allocation0], 64
    %v137 = vld [vmem:[%s136] ss:$8 sm:$0xf]
    %s138 = scalar_lea.vmem [#allocation0], 64
    %v139 = vld [vmem:[%s138] ss:$8 sm:$0xf0]
    %vm140 = vcmask 1047556
    %v141 = vsel %vm140, %v139, %v137
    %vm142 = vcmask 261120
    %s143 = scalar_lea.vmem %s1, 8
    %144 = vst.msk [vmem:[%s143] sm:$0xff] %vm142, %v141
    %s145 = scalar_lea.vmem [#allocation0], 128
    %v146 = vld [vmem:[%s145] ss:$8 sm:$0xf]
    %s147 = scalar_lea.vmem [#allocation0], 128
    %v148 = vld [vmem:[%s147] ss:$8 sm:$0xf0]
    %vm149 = vcmask 1047556
    %v150 = vsel %vm149, %v148, %v146
    %vm151 = vcmask 261120
    %s152 = scalar_lea.vmem %s1, 16
    %153 = vst.msk [vmem:[%s152] sm:$0xff] %vm151, %v150
    %s154 = scalar_lea.vmem [#allocation0], 192
    %v155 = vld [vmem:[%s154] ss:$8 sm:$0xf]
    %s156 = scalar_lea.vmem [#allocation0], 192
    %v157 = vld [vmem:[%s156] ss:$8 sm:$0xf0]
    %vm158 = vcmask 1047556
    %v159 = vsel %vm158, %v157, %v155
    %vm160 = vcmask 261120
    %s161 = scalar_lea.vmem %s1, 24
    %162 = vst.msk [vmem:[%s161] sm:$0xff] %vm160, %v159
    %s163 = scalar_lea.vmem [#allocation0], 3
    %v164 = vld [vmem:[%s163] ss:$8 sm:$0xf]
    %s165 = scalar_lea.vmem [#allocation0], 3
    %v166 = vld [vmem:[%s165] ss:$8 sm:$0xf0]
    %vm167 = vcmask 1047556
    %v168 = vsel %vm167, %v166, %v164
    %169 = vrot.lane.b32.xlu0 %v168, 96
    %v170 = vpop.permute.xlu0 %169
    %vm171 = vcmask 1048320
    %172 = vst.msk [vmem:[%s1] sm:$0xff] %vm171, %v170
    %s173 = scalar_lea.vmem [#allocation0], 67
    %v174 = vld [vmem:[%s173] ss:$8 sm:$0xf]
    %s175 = scalar_lea.vmem [#allocation0], 67
    %v176 = vld [vmem:[%s175] ss:$8 sm:$0xf0]
    %vm177 = vcmask 1047556
    %v178 = vsel %vm177, %v176, %v174
    %179 = vrot.lane.b32.xlu0 %v178, 96
    %v180 = vpop.permute.xlu0 %179
    %vm181 = vcmask 1048320
    %s182 = scalar_lea.vmem %s1, 8
    %183 = vst.msk [vmem:[%s182] sm:$0xff] %vm181, %v180
    %s184 = scalar_lea.vmem [#allocation0], 131
    %v185 = vld [vmem:[%s184] ss:$8 sm:$0xf]
    %s186 = scalar_lea.vmem [#allocation0], 131
    %v187 = vld [vmem:[%s186] ss:$8 sm:$0xf0]
    %vm188 = vcmask 1047556
    %v189 = vsel %vm188, %v187, %v185
    %190 = vrot.lane.b32.xlu0 %v189, 96
    %v191 = vpop.permute.xlu0 %190
    %vm192 = vcmask 1048320
    %s193 = scalar_lea.vmem %s1, 16
    %194 = vst.msk [vmem:[%s193] sm:$0xff] %vm192, %v191
    %s195 = scalar_lea.vmem [#allocation0], 195
    %v196 = vld [vmem:[%s195] ss:$8 sm:$0xf]
    %s197 = scalar_lea.vmem [#allocation0], 195
    %v198 = vld [vmem:[%s197] ss:$8 sm:$0xf0]
    %vm199 = vcmask 1047556
    %v200 = vsel %vm199, %v198, %v196
    %201 = vrot.lane.b32.xlu0 %v200, 96
    %v202 = vpop.permute.xlu0 %201
    %vm203 = vcmask 1048320
    %s204 = scalar_lea.vmem %s1, 24
    %205 = vst.msk [vmem:[%s204] sm:$0xff] %vm203, %v202
    %s206 = scalar_lea.vmem [#allocation0], 2
    %v207 = vld [vmem:[%s206] ss:$8 sm:$0xf]
    %s208 = scalar_lea.vmem [#allocation0], 2
    %v209 = vld [vmem:[%s208] ss:$8 sm:$0xf0]
    %vm210 = vcmask 1047556
    %v211 = vsel %vm210, %v209, %v207
    %212 = vrot.lane.b32.xlu0 %v211, 64
    %v213 = vpop.permute.xlu0 %212
    %vm214 = vcmask 785920
    %215 = vst.msk [vmem:[%s1] sm:$0xff] %vm214, %v213
    %s216 = scalar_lea.vmem [#allocation0], 66
    %v217 = vld [vmem:[%s216] ss:$8 sm:$0xf]
    %s218 = scalar_lea.vmem [#allocation0], 66
    %v219 = vld [vmem:[%s218] ss:$8 sm:$0xf0]
    %vm220 = vcmask 1047556
    %v221 = vsel %vm220, %v219, %v217
    %222 = vrot.lane.b32.xlu0 %v221, 64
    %v223 = vpop.permute.xlu0 %222
    %vm224 = vcmask 785920
    %s225 = scalar_lea.vmem %s1, 8
    %226 = vst.msk [vmem:[%s225] sm:$0xff] %vm224, %v223
    %s227 = scalar_lea.vmem [#allocation0], 130
    %v228 = vld [vmem:[%s227] ss:$8 sm:$0xf]
    %s229 = scalar_lea.vmem [#allocation0], 130
    %v230 = vld [vmem:[%s229] ss:$8 sm:$0xf0]
    %vm231 = vcmask 1047556
    %v232 = vsel %vm231, %v230, %v228
    %233 = vrot.lane.b32.xlu0 %v232, 64
    %v234 = vpop.permute.xlu0 %233
    %vm235 = vcmask 785920
    %s236 = scalar_lea.vmem %s1, 16
    %237 = vst.msk [vmem:[%s236] sm:$0xff] %vm235, %v234
    %s238 = scalar_lea.vmem [#allocation0], 194
    %v239 = vld [vmem:[%s238] ss:$8 sm:$0xf]
    %s240 = scalar_lea.vmem [#allocation0], 194
    %v241 = vld [vmem:[%s240] ss:$8 sm:$0xf0]
    %vm242 = vcmask 1047556
    %v243 = vsel %vm242, %v241, %v239
    %244 = vrot.lane.b32.xlu0 %v243, 64
    %v245 = vpop.permute.xlu0 %244
    %vm246 = vcmask 785920
    %s247 = scalar_lea.vmem %s1, 24
    %248 = vst.msk [vmem:[%s247] sm:$0xff] %vm246, %v245
    %s249 = scalar_lea.vmem [#allocation0], 1
    %v250 = vld [vmem:[%s249] ss:$8 sm:$0xf]
    %s251 = scalar_lea.vmem [#allocation0], 1
    %v252 = vld [vmem:[%s251] ss:$8 sm:$0xf0]
    %vm253 = vcmask 1047556
    %v254 = vsel %vm253, %v252, %v250
    %255 = vrot.lane.b32.xlu0 %v254, 32
    %v256 = vpop.permute.xlu0 %255
    %vm257 = vcmask 523520
    %258 = vst.msk [vmem:[%s1] sm:$0xff] %vm257, %v256
    %s259 = scalar_lea.vmem [#allocation0], 65
    %v260 = vld [vmem:[%s259] ss:$8 sm:$0xf]
    %s261 = scalar_lea.vmem [#allocation0], 65
    %v262 = vld [vmem:[%s261] ss:$8 sm:$0xf0]
    %vm263 = vcmask 1047556
    %v264 = vsel %vm263, %v262, %v260
    %265 = vrot.lane.b32.xlu0 %v264, 32
    %v266 = vpop.permute.xlu0 %265
    %vm267 = vcmask 523520
    %s268 = scalar_lea.vmem %s1, 8
    %269 = vst.msk [vmem:[%s268] sm:$0xff] %vm267, %v266
    %s270 = scalar_lea.vmem [#allocation0], 129
    %v271 = vld [vmem:[%s270] ss:$8 sm:$0xf]
    %s272 = scalar_lea.vmem [#allocation0], 129
    %v273 = vld [vmem:[%s272] ss:$8 sm:$0xf0]
    %vm274 = vcmask 1047556
    %v275 = vsel %vm274, %v273, %v271
    %276 = vrot.lane.b32.xlu0 %v275, 32
    %v277 = vpop.permute.xlu0 %276
    %vm278 = vcmask 523520
    %s279 = scalar_lea.vmem %s1, 16
    %280 = vst.msk [vmem:[%s279] sm:$0xff] %vm278, %v277
    %s281 = scalar_lea.vmem [#allocation0], 193
    %v282 = vld [vmem:[%s281] ss:$8 sm:$0xf]
    %s283 = scalar_lea.vmem [#allocation0], 193
    %v284 = vld [vmem:[%s283] ss:$8 sm:$0xf0]
    %vm285 = vcmask 1047556
    %v286 = vsel %vm285, %v284, %v282
    %287 = vrot.lane.b32.xlu0 %v286, 32
    %v288 = vpop.permute.xlu0 %287
    %vm289 = vcmask 523520
    %s290 = scalar_lea.vmem %s1, 24
    %291 = vst.msk [vmem:[%s290] sm:$0xff] %vm289, %v288

// kernel: tile.23
$region0: #{tile.23}
  #allocation0 [shape = 's32[1]{0}', space=sflag, size = 0x4, scoped, tag = 'scoped memory for tile.23']
  %s0 = inlined_call_operand.vmem [shape: f32[32], index: 0, kind: input, shape index: {}]
  %s1 = inlined_call_operand.vmem [shape: f32[4,32], index: 1, kind: output, shape index: {}]
  // Predicated region
  $region2: #{tile.23} parent=0 // pred_check
    _
  $region3: #{tile.23} parent=0 // pred_check_branch
    %3 = sbr.rel (0) target = $region5
  $region4: #{tile.23} parent=0 // pred_region
    _
  $region5: #{tile.23} parent=0 // pred_fallthru
    _
  %v4 = vld [vmem:[%s0] ss:$0 sm:$0xff]
  %5 = vst [vmem:[%s1] sm:$0xf] %v4

// kernel: tile.24
$region0: #{tile.24}
  %s0 = inlined_call_operand.vmem [shape: f32[4,32], index: 0, kind: input, shape index: {}]
  %s1 = inlined_call_operand.vmem [shape: f32[1,128], index: 1, kind: output, shape index: {}]
  $region1: #{tile.24} parent=0
    #allocation0 [shape = 'u8[4096]{0}', space=vmem, size = 0x1000, scoped, tag = 'scoped mem for output reshape']
    #allocation1 [shape = 'u8[4096]{0}', space=vmem, size = 0x1000, scoped, tag = 'scoped mem for input reshape']
    %s3 = ssub.s32 16, 1
    %v4 = vld [vmem:[%s0] sm:%s3]
    %5 = vst [vmem:[#allocation1] sm:%s3] %v4
    %v6 = vld [vmem:[#allocation1] sm:$0x1]
    %vm7 = vcmask 261120
    %8 = vst.msk [vmem:[#allocation0] sm:$0x1] %vm7, %v6
    %s9 = scalar_lea.vmem [#allocation1], 3
    %v10 = vld [vmem:[%s9] sm:$0x1]
    %11 = vrot.lane.b32.xlu0 %v10, 96
    %v12 = vpop.permute.xlu0 %11
    %vm13 = vcmask 1048320
    %14 = vst.msk [vmem:[#allocation0] sm:$0x1] %vm13, %v12
    %s15 = scalar_lea.vmem [#allocation1], 2
    %v16 = vld [vmem:[%s15] sm:$0x1]
    %17 = vrot.lane.b32.xlu0 %v16, 64
    %v18 = vpop.permute.xlu0 %17
    %vm19 = vcmask 785920
    %20 = vst.msk [vmem:[#allocation0] sm:$0x1] %vm19, %v18
    %s21 = scalar_lea.vmem [#allocation1], 1
    %v22 = vld [vmem:[%s21] sm:$0x1]
    %23 = vrot.lane.b32.xlu0 %v22, 32
    %v24 = vpop.permute.xlu0 %23
    %vm25 = vcmask 523520
    %26 = vst.msk [vmem:[#allocation0] sm:$0x1] %vm25, %v24
    %s28 = ssub.s32 2, 1
    %v29 = vld [vmem:[#allocation0] sm:%s28]
    %s31 = ssub.s32 2, 1
    %32 = vst [vmem:[%s1] sm:%s31] %v29

// kernel: fuzzy_mha_forward.1
$region0: #{fuzzy_mha_forward.1}
  #allocation0 [shape = 'u32[]', space=smem, size = 0x4, offset = 0x4, fixed_abs, tag = 'smem constant byte address 0x4 - core index']
  #allocation1 [shape = 'u32[72,128]{1,0:T(1,128)}', space=vmem, size = 0x9000, scoped, tag = 'internal scratch']
  %s0 = inlined_call_operand.vmem [shape: f32[16,32], index: 0, kind: input, shape index: {}]
  %s1 = inlined_call_operand.vmem [shape: f32[16,32], index: 1, kind: input, shape index: {}]
  %s2 = inlined_call_operand.vmem [shape: f32[32,128], index: 2, kind: input, shape index: {}]
  %s3 = inlined_call_operand.vmem [shape: f32[1,128], index: 3, kind: input, shape index: {}]
  %s4 = inlined_call_operand.vmem [shape: f32[32,128], index: 4, kind: input, shape index: {}]
  %s5 = inlined_call_operand.vmem [shape: f32[1,128], index: 5, kind: input, shape index: {}]
  %s6 = inlined_call_operand.vmem [shape: f32[1,128], index: 6, kind: input, shape index: {}]
  %s7 = inlined_call_operand.vmem [shape: f32[1,128], index: 7, kind: input, shape index: {}]
  %s8 = inlined_call_operand.vmem [shape: f32[128,128], index: 8, kind: input, shape index: {}]
  %s9 = inlined_call_operand.vmem [shape: f32[128,128], index: 9, kind: input, shape index: {}]
  %s10 = inlined_call_operand.vmem [shape: f32[8,8], index: 10, kind: input, shape index: {}]
  %s11 = inlined_call_operand.vmem [shape: f32[8,128], index: 11, kind: input, shape index: {}]
  %s12 = inlined_call_operand.vmem [shape: f32[8,128], index: 12, kind: input, shape index: {}]
  %s13 = inlined_call_operand.vmem [shape: f32[128,32], index: 13, kind: input, shape index: {}]
  %s14 = inlined_call_operand.vmem [shape: f32[1,32], index: 14, kind: input, shape index: {}]
  %s15 = inlined_call_operand.hbm [shape: f32[16,32], index: 15, kind: output, shape index: {}]
  %s16 = sld [smem:[#allocation0]]
  $region93: #{fuzzy_mha_forward.1} parent=0
    _
  %s18 = ssub.s32 1, %s16
  %s19 = scalar_select 0, %s18, %s16
  $region1: #{fuzzy_mha_forward.1} parent=0
    #allocation2 [shape = 'u8[8192]{0}', space=vmem, size = 0x2000, scoped, tag = 'output window, operand 0']
    #allocation3 [shape = 's32[2]{0}', space=sflag, size = 0x8, scoped, tag = 'scoped memory for fuzzy_mha_forward.1']
    %20 = vsyncpa [#allocation3], 0
    %s21 = scalar_lea.sflag [#allocation3], 1
    %22 = vsyncpa %s21, 0
    loop: start=0, step=1, limit=4
    $region2: #{fuzzy_mha_forward.1} parent=1 // loop_pre_header
      _
    $region3: #{fuzzy_mha_forward.1} parent=1 // loop_header
      %s24 = sphi 0, %s28
      %p25 = scmp.ge.s32.totalorder %s24, 4
      %s34 = sphi 0, %s36
      %s37 = sphi 0, %s34
      %s38 = sphi 0, %s37
      %s54 = sphi 0, %s38
      %s60 = sphi 0, %s62
      %s63 = sphi 0, %s60
      %s64 = sphi 0, %s63
      %s80 = sphi 0, %s64
      %s84 = sphi 0, %s84
      %s86 = sphi 0, %s84
      %s87 = sphi 0, %s86
      %s101 = sphi 0, %s87
      %s105 = sphi 0, %s105
      %s107 = sphi 0, %s105
      %s108 = sphi 0, %s107
      %s122 = sphi 0, %s108
      %s126 = sphi 0, %s126
      %s128 = sphi 0, %s126
      %s129 = sphi 0, %s128
      %s143 = sphi 0, %s129
      %s147 = sphi 0, %s147
      %s149 = sphi 0, %s147
      %s150 = sphi 0, %s149
      %s164 = sphi 0, %s150
      %s168 = sphi 0, %s168
      %s170 = sphi 0, %s168
      %s171 = sphi 0, %s170
      %s185 = sphi 0, %s171
      %s189 = sphi 0, %s189
      %s191 = sphi 0, %s189
      %s192 = sphi 0, %s191
      %s206 = sphi 0, %s192
      %s210 = sphi 0, %s210
      %s212 = sphi 0, %s210
      %s213 = sphi 0, %s212
      %s227 = sphi 0, %s213
      %s231 = sphi 0, %s231
      %s233 = sphi 0, %s231
      %s234 = sphi 0, %s233
      %s248 = sphi 0, %s234
      %s252 = sphi 0, %s252
      %s254 = sphi 0, %s252
      %s255 = sphi 0, %s254
      %s269 = sphi 0, %s255
      %s273 = sphi 0, %s273
      %s275 = sphi 0, %s273
      %s276 = sphi 0, %s275
      %s290 = sphi 0, %s276
      %s294 = sphi 0, %s294
      %s296 = sphi 0, %s294
      %s297 = sphi 0, %s296
      %s311 = sphi 0, %s297
      %s315 = sphi 0, %s315
      %s317 = sphi 0, %s315
      %s318 = sphi 0, %s317
      %s332 = sphi 0, %s318
      %s336 = sphi 0, %s336
      %s338 = sphi 0, %s336
      %s339 = sphi 0, %s338
      %s353 = sphi 0, %s339
      %s359 = sphi 0, %s361
      %s362 = sphi 0, %s359
      %s363 = sphi 0, %s362
      %s379 = sphi 0, %s363
    $region4: #{fuzzy_mha_forward.1} parent=1 // loop_header_branch
      %27 = sbr.rel (%p25) target = $region8
    $region5: #{fuzzy_mha_forward.1} parent=1 // loop_body
      %s29 = ssub.s32 %s24, 1
      %s30 = ssub.s32 %s24, 2
      %s31 = sadd.s32 %s24, 1
      %s32 = ssub.s32 %s24, %s31
      %p33 = scmp.eq.s32.totalorder %s32, 0
      %s35 = sadd.s32 %s34, 1
      %s36 = scalar_select %p33, %s34, %s35
      %p39 = pneg %p33
      %p40 = scmp.eq.s32.totalorder %s24, 1
      %p41 = por %p39, %p40
      %p42 = scmp.ne.s32.totalorder %s34, %s37
      %p43 = scmp.eq.s32.totalorder %s24, 0
      %p44 = por %p42, %p43
      %p45 = scmp.ne.s32.totalorder %s34, %s37
      %p46 = scmp.eq.s32.totalorder %s29, 1
      %p47 = por %p45, %p46
      %p48 = scmp.ne.s32.totalorder %s37, %s38
      %p49 = scmp.eq.s32.totalorder %s29, 0
      %p50 = por %p48, %p49
      %p51 = scmp.ne.s32.totalorder %s37, %s38
      %p52 = scmp.eq.s32.totalorder %s30, 1
      %p53 = por %p51, %p52
      %p55 = scmp.ne.s32.totalorder %s38, %s54
      %p56 = scmp.eq.s32.totalorder %s30, 0
      %p57 = por %p55, %p56
      %s58 = ssub.s32 %s24, %s31
      %p59 = scmp.eq.s32.totalorder %s58, 0
      %s61 = sadd.s32 %s60, 1
      %s62 = scalar_select %p59, %s60, %s61
      %p65 = pneg %p59
      %p66 = scmp.eq.s32.totalorder %s24, 1
      %p67 = por %p65, %p66
      %p68 = scmp.ne.s32.totalorder %s60, %s63
      %p69 = scmp.eq.s32.totalorder %s24, 0
      %p70 = por %p68, %p69
      %p71 = scmp.ne.s32.totalorder %s60, %s63
      %p72 = scmp.eq.s32.totalorder %s29, 1
      %p73 = por %p71, %p72
      %p74 = scmp.ne.s32.totalorder %s63, %s64
      %p75 = scmp.eq.s32.totalorder %s29, 0
      %p76 = por %p74, %p75
      %p77 = scmp.ne.s32.totalorder %s63, %s64
      %p78 = scmp.eq.s32.totalorder %s30, 1
      %p79 = por %p77, %p78
      %p81 = scmp.ne.s32.totalorder %s64, %s80
      %p82 = scmp.eq.s32.totalorder %s30, 0
      %p83 = por %p81, %p82
      %s85 = sadd.s32 %s84, 1
      %p88 = scmp.eq.s32.totalorder %s24, 1
      %p89 = scmp.ne.s32.totalorder %s84, %s86
      %p90 = scmp.eq.s32.totalorder %s24, 0
      %p91 = por %p89, %p90
      %p92 = scmp.ne.s32.totalorder %s84, %s86
      %p93 = scmp.eq.s32.totalorder %s29, 1
      %p94 = por %p92, %p93
      %p95 = scmp.ne.s32.totalorder %s86, %s87
      %p96 = scmp.eq.s32.totalorder %s29, 0
      %p97 = por %p95, %p96
      %p98 = scmp.ne.s32.totalorder %s86, %s87
      %p99 = scmp.eq.s32.totalorder %s30, 1
      %p100 = por %p98, %p99
      %p102 = scmp.ne.s32.totalorder %s87, %s101
      %p103 = scmp.eq.s32.totalorder %s30, 0
      %p104 = por %p102, %p103
      %s106 = sadd.s32 %s105, 1
      %p109 = scmp.eq.s32.totalorder %s24, 1
      %p110 = scmp.ne.s32.totalorder %s105, %s107
      %p111 = scmp.eq.s32.totalorder %s24, 0
      %p112 = por %p110, %p111
      %p113 = scmp.ne.s32.totalorder %s105, %s107
      %p114 = scmp.eq.s32.totalorder %s29, 1
      %p115 = por %p113, %p114
      %p116 = scmp.ne.s32.totalorder %s107, %s108
      %p117 = scmp.eq.s32.totalorder %s29, 0
      %p118 = por %p116, %p117
      %p119 = scmp.ne.s32.totalorder %s107, %s108
      %p120 = scmp.eq.s32.totalorder %s30, 1
      %p121 = por %p119, %p120
      %p123 = scmp.ne.s32.totalorder %s108, %s122
      %p124 = scmp.eq.s32.totalorder %s30, 0
      %p125 = por %p123, %p124
      %s127 = sadd.s32 %s126, 1
      %p130 = scmp.eq.s32.totalorder %s24, 1
      %p131 = scmp.ne.s32.totalorder %s126, %s128
      %p132 = scmp.eq.s32.totalorder %s24, 0
      %p133 = por %p131, %p132
      %p134 = scmp.ne.s32.totalorder %s126, %s128
      %p135 = scmp.eq.s32.totalorder %s29, 1
      %p136 = por %p134, %p135
      %p137 = scmp.ne.s32.totalorder %s128, %s129
      %p138 = scmp.eq.s32.totalorder %s29, 0
      %p139 = por %p137, %p138
      %p140 = scmp.ne.s32.totalorder %s128, %s129
      %p141 = scmp.eq.s32.totalorder %s30, 1
      %p142 = por %p140, %p141
      %p144 = scmp.ne.s32.totalorder %s129, %s143
      %p145 = scmp.eq.s32.totalorder %s30, 0
      %p146 = por %p144, %p145
      %s148 = sadd.s32 %s147, 1
      %p151 = scmp.eq.s32.totalorder %s24, 1
      %p152 = scmp.ne.s32.totalorder %s147, %s149
      %p153 = scmp.eq.s32.totalorder %s24, 0
      %p154 = por %p152, %p153
      %p155 = scmp.ne.s32.totalorder %s147, %s149
      %p156 = scmp.eq.s32.totalorder %s29, 1
      %p157 = por %p155, %p156
      %p158 = scmp.ne.s32.totalorder %s149, %s150
      %p159 = scmp.eq.s32.totalorder %s29, 0
      %p160 = por %p158, %p159
      %p161 = scmp.ne.s32.totalorder %s149, %s150
      %p162 = scmp.eq.s32.totalorder %s30, 1
      %p163 = por %p161, %p162
      %p165 = scmp.ne.s32.totalorder %s150, %s164
      %p166 = scmp.eq.s32.totalorder %s30, 0
      %p167 = por %p165, %p166
      %s169 = sadd.s32 %s168, 1
      %p172 = scmp.eq.s32.totalorder %s24, 1
      %p173 = scmp.ne.s32.totalorder %s168, %s170
      %p174 = scmp.eq.s32.totalorder %s24, 0
      %p175 = por %p173, %p174
      %p176 = scmp.ne.s32.totalorder %s168, %s170
      %p177 = scmp.eq.s32.totalorder %s29, 1
      %p178 = por %p176, %p177
      %p179 = scmp.ne.s32.totalorder %s170, %s171
      %p180 = scmp.eq.s32.totalorder %s29, 0
      %p181 = por %p179, %p180
      %p182 = scmp.ne.s32.totalorder %s170, %s171
      %p183 = scmp.eq.s32.totalorder %s30, 1
      %p184 = por %p182, %p183
      %p186 = scmp.ne.s32.totalorder %s171, %s185
      %p187 = scmp.eq.s32.totalorder %s30, 0
      %p188 = por %p186, %p187
      %s190 = sadd.s32 %s189, 1
      %p193 = scmp.eq.s32.totalorder %s24, 1
      %p194 = scmp.ne.s32.totalorder %s189, %s191
      %p195 = scmp.eq.s32.totalorder %s24, 0
      %p196 = por %p194, %p195
      %p197 = scmp.ne.s32.totalorder %s189, %s191
      %p198 = scmp.eq.s32.totalorder %s29, 1
      %p199 = por %p197, %p198
      %p200 = scmp.ne.s32.totalorder %s191, %s192
      %p201 = scmp.eq.s32.totalorder %s29, 0
      %p202 = por %p200, %p201
      %p203 = scmp.ne.s32.totalorder %s191, %s192
      %p204 = scmp.eq.s32.totalorder %s30, 1
      %p205 = por %p203, %p204
      %p207 = scmp.ne.s32.totalorder %s192, %s206
      %p208 = scmp.eq.s32.totalorder %s30, 0
      %p209 = por %p207, %p208
      %s211 = sadd.s32 %s210, 1
      %p214 = scmp.eq.s32.totalorder %s24, 1
      %p215 = scmp.ne.s32.totalorder %s210, %s212
      %p216 = scmp.eq.s32.totalorder %s24, 0
      %p217 = por %p215, %p216
      %p218 = scmp.ne.s32.totalorder %s210, %s212
      %p219 = scmp.eq.s32.totalorder %s29, 1
      %p220 = por %p218, %p219
      %p221 = scmp.ne.s32.totalorder %s212, %s213
      %p222 = scmp.eq.s32.totalorder %s29, 0
      %p223 = por %p221, %p222
      %p224 = scmp.ne.s32.totalorder %s212, %s213
      %p225 = scmp.eq.s32.totalorder %s30, 1
      %p226 = por %p224, %p225
      %p228 = scmp.ne.s32.totalorder %s213, %s227
      %p229 = scmp.eq.s32.totalorder %s30, 0
      %p230 = por %p228, %p229
      %s232 = sadd.s32 %s231, 1
      %p235 = scmp.eq.s32.totalorder %s24, 1
      %p236 = scmp.ne.s32.totalorder %s231, %s233
      %p237 = scmp.eq.s32.totalorder %s24, 0
      %p238 = por %p236, %p237
      %p239 = scmp.ne.s32.totalorder %s231, %s233
      %p240 = scmp.eq.s32.totalorder %s29, 1
      %p241 = por %p239, %p240
      %p242 = scmp.ne.s32.totalorder %s233, %s234
      %p243 = scmp.eq.s32.totalorder %s29, 0
      %p244 = por %p242, %p243
      %p245 = scmp.ne.s32.totalorder %s233, %s234
      %p246 = scmp.eq.s32.totalorder %s30, 1
      %p247 = por %p245, %p246
      %p249 = scmp.ne.s32.totalorder %s234, %s248
      %p250 = scmp.eq.s32.totalorder %s30, 0
      %p251 = por %p249, %p250
      %s253 = sadd.s32 %s252, 1
      %p256 = scmp.eq.s32.totalorder %s24, 1
      %p257 = scmp.ne.s32.totalorder %s252, %s254
      %p258 = scmp.eq.s32.totalorder %s24, 0
      %p259 = por %p257, %p258
      %p260 = scmp.ne.s32.totalorder %s252, %s254
      %p261 = scmp.eq.s32.totalorder %s29, 1
      %p262 = por %p260, %p261
      %p263 = scmp.ne.s32.totalorder %s254, %s255
      %p264 = scmp.eq.s32.totalorder %s29, 0
      %p265 = por %p263, %p264
      %p266 = scmp.ne.s32.totalorder %s254, %s255
      %p267 = scmp.eq.s32.totalorder %s30, 1
      %p268 = por %p266, %p267
      %p270 = scmp.ne.s32.totalorder %s255, %s269
      %p271 = scmp.eq.s32.totalorder %s30, 0
      %p272 = por %p270, %p271
      %s274 = sadd.s32 %s273, 1
      %p277 = scmp.eq.s32.totalorder %s24, 1
      %p278 = scmp.ne.s32.totalorder %s273, %s275
      %p279 = scmp.eq.s32.totalorder %s24, 0
      %p280 = por %p278, %p279
      %p281 = scmp.ne.s32.totalorder %s273, %s275
      %p282 = scmp.eq.s32.totalorder %s29, 1
      %p283 = por %p281, %p282
      %p284 = scmp.ne.s32.totalorder %s275, %s276
      %p285 = scmp.eq.s32.totalorder %s29, 0
      %p286 = por %p284, %p285
      %p287 = scmp.ne.s32.totalorder %s275, %s276
      %p288 = scmp.eq.s32.totalorder %s30, 1
      %p289 = por %p287, %p288
      %p291 = scmp.ne.s32.totalorder %s276, %s290
      %p292 = scmp.eq.s32.totalorder %s30, 0
      %p293 = por %p291, %p292
      %s295 = sadd.s32 %s294, 1
      %p298 = scmp.eq.s32.totalorder %s24, 1
      %p299 = scmp.ne.s32.totalorder %s294, %s296
      %p300 = scmp.eq.s32.totalorder %s24, 0
      %p301 = por %p299, %p300
      %p302 = scmp.ne.s32.totalorder %s294, %s296
      %p303 = scmp.eq.s32.totalorder %s29, 1
      %p304 = por %p302, %p303
      %p305 = scmp.ne.s32.totalorder %s296, %s297
      %p306 = scmp.eq.s32.totalorder %s29, 0
      %p307 = por %p305, %p306
      %p308 = scmp.ne.s32.totalorder %s296, %s297
      %p309 = scmp.eq.s32.totalorder %s30, 1
      %p310 = por %p308, %p309
      %p312 = scmp.ne.s32.totalorder %s297, %s311
      %p313 = scmp.eq.s32.totalorder %s30, 0
      %p314 = por %p312, %p313
      %s316 = sadd.s32 %s315, 1
      %p319 = scmp.eq.s32.totalorder %s24, 1
      %p320 = scmp.ne.s32.totalorder %s315, %s317
      %p321 = scmp.eq.s32.totalorder %s24, 0
      %p322 = por %p320, %p321
      %p323 = scmp.ne.s32.totalorder %s315, %s317
      %p324 = scmp.eq.s32.totalorder %s29, 1
      %p325 = por %p323, %p324
      %p326 = scmp.ne.s32.totalorder %s317, %s318
      %p327 = scmp.eq.s32.totalorder %s29, 0
      %p328 = por %p326, %p327
      %p329 = scmp.ne.s32.totalorder %s317, %s318
      %p330 = scmp.eq.s32.totalorder %s30, 1
      %p331 = por %p329, %p330
      %p333 = scmp.ne.s32.totalorder %s318, %s332
      %p334 = scmp.eq.s32.totalorder %s30, 0
      %p335 = por %p333, %p334
      %s337 = sadd.s32 %s336, 1
      %p340 = scmp.eq.s32.totalorder %s24, 1
      %p341 = scmp.ne.s32.totalorder %s336, %s338
      %p342 = scmp.eq.s32.totalorder %s24, 0
      %p343 = por %p341, %p342
      %p344 = scmp.ne.s32.totalorder %s336, %s338
      %p345 = scmp.eq.s32.totalorder %s29, 1
      %p346 = por %p344, %p345
      %p347 = scmp.ne.s32.totalorder %s338, %s339
      %p348 = scmp.eq.s32.totalorder %s29, 0
      %p349 = por %p347, %p348
      %p350 = scmp.ne.s32.totalorder %s338, %s339
      %p351 = scmp.eq.s32.totalorder %s30, 1
      %p352 = por %p350, %p351
      %p354 = scmp.ne.s32.totalorder %s339, %s353
      %p355 = scmp.eq.s32.totalorder %s30, 0
      %p356 = por %p354, %p355
      %s357 = ssub.s32 %s24, %s31
      %p358 = scmp.eq.s32.totalorder %s357, 0
      %s360 = sadd.s32 %s359, 1
      %s361 = scalar_select %p358, %s359, %s360
      %p364 = pneg %p358
      %p365 = scmp.eq.s32.totalorder %s24, 1
      %p366 = por %p364, %p365
      %p367 = scmp.ne.s32.totalorder %s359, %s362
      %p368 = scmp.eq.s32.totalorder %s24, 0
      %p369 = por %p367, %p368
      %p370 = scmp.ne.s32.totalorder %s359, %s362
      %p371 = scmp.eq.s32.totalorder %s29, 1
      %p372 = por %p370, %p371
      %p373 = scmp.ne.s32.totalorder %s362, %s363
      %p374 = scmp.eq.s32.totalorder %s29, 0
      %p375 = por %p373, %p374
      %p376 = scmp.ne.s32.totalorder %s362, %s363
      %p377 = scmp.eq.s32.totalorder %s30, 1
      %p378 = por %p376, %p377
      %p380 = scmp.ne.s32.totalorder %s363, %s379
      %p381 = scmp.eq.s32.totalorder %s30, 0
      %p382 = por %p380, %p381
      %p383 = scmp.le.s32.totalorder 1, %s24
      %p384 = scmp.lt.s32.totalorder %s24, 3
      %p385 = pnand %p383, %p384
      %p386 = pneg %p385
      // Predicated region
      $region9: #{fuzzy_mha_forward.1} parent=5 // pred_check
        _
      $region10: #{fuzzy_mha_forward.1} parent=5 // pred_check_branch
        %388 = sbr.rel (%p385) target = $region12
      $region11: #{fuzzy_mha_forward.1} parent=5 // pred_region
        %s389 = ssub.s32 %s24, 1
        // Predicated region
        $region13: #{fuzzy_mha_forward.1} parent=11 // pred_check
          %p390 = pneg %p97
        $region14: #{fuzzy_mha_forward.1} parent=11 // pred_check_branch
          %392 = sbr.rel (%p390) target = $region16
        $region15: #{fuzzy_mha_forward.1} parent=11 // pred_region
          _
        $region16: #{fuzzy_mha_forward.1} parent=11 // pred_fallthru
          _
        // Predicated region
        $region17: #{fuzzy_mha_forward.1} parent=11 // pred_check
          %p393 = pneg %p118
        $region18: #{fuzzy_mha_forward.1} parent=11 // pred_check_branch
          %395 = sbr.rel (%p393) target = $region20
        $region19: #{fuzzy_mha_forward.1} parent=11 // pred_region
          _
        $region20: #{fuzzy_mha_forward.1} parent=11 // pred_fallthru
          _
        // Predicated region
        $region21: #{fuzzy_mha_forward.1} parent=11 // pred_check
          %p396 = pneg %p139
        $region22: #{fuzzy_mha_forward.1} parent=11 // pred_check_branch
          %398 = sbr.rel (%p396) target = $region24
        $region23: #{fuzzy_mha_forward.1} parent=11 // pred_region
          _
        $region24: #{fuzzy_mha_forward.1} parent=11 // pred_fallthru
          _
        // Predicated region
        $region25: #{fuzzy_mha_forward.1} parent=11 // pred_check
          %p399 = pneg %p160
        $region26: #{fuzzy_mha_forward.1} parent=11 // pred_check_branch
          %401 = sbr.rel (%p399) target = $region28
        $region27: #{fuzzy_mha_forward.1} parent=11 // pred_region
          _
        $region28: #{fuzzy_mha_forward.1} parent=11 // pred_fallthru
          _
        // Predicated region
        $region29: #{fuzzy_mha_forward.1} parent=11 // pred_check
          %p402 = pneg %p181
        $region30: #{fuzzy_mha_forward.1} parent=11 // pred_check_branch
          %404 = sbr.rel (%p402) target = $region32
        $region31: #{fuzzy_mha_forward.1} parent=11 // pred_region
          _
        $region32: #{fuzzy_mha_forward.1} parent=11 // pred_fallthru
          _
        // Predicated region
        $region33: #{fuzzy_mha_forward.1} parent=11 // pred_check
          %p405 = pneg %p202
        $region34: #{fuzzy_mha_forward.1} parent=11 // pred_check_branch
          %407 = sbr.rel (%p405) target = $region36
        $region35: #{fuzzy_mha_forward.1} parent=11 // pred_region
          _
        $region36: #{fuzzy_mha_forward.1} parent=11 // pred_fallthru
          _
        // Predicated region
        $region37: #{fuzzy_mha_forward.1} parent=11 // pred_check
          %p408 = pneg %p223
        $region38: #{fuzzy_mha_forward.1} parent=11 // pred_check_branch
          %410 = sbr.rel (%p408) target = $region40
        $region39: #{fuzzy_mha_forward.1} parent=11 // pred_region
          _
        $region40: #{fuzzy_mha_forward.1} parent=11 // pred_fallthru
          _
        // Predicated region
        $region41: #{fuzzy_mha_forward.1} parent=11 // pred_check
          %p411 = pneg %p244
        $region42: #{fuzzy_mha_forward.1} parent=11 // pred_check_branch
          %413 = sbr.rel (%p411) target = $region44
        $region43: #{fuzzy_mha_forward.1} parent=11 // pred_region
          _
        $region44: #{fuzzy_mha_forward.1} parent=11 // pred_fallthru
          _
        // Predicated region
        $region45: #{fuzzy_mha_forward.1} parent=11 // pred_check
          %p414 = pneg %p265
        $region46: #{fuzzy_mha_forward.1} parent=11 // pred_check_branch
          %416 = sbr.rel (%p414) target = $region48
        $region47: #{fuzzy_mha_forward.1} parent=11 // pred_region
          _
        $region48: #{fuzzy_mha_forward.1} parent=11 // pred_fallthru
          _
        // Predicated region
        $region49: #{fuzzy_mha_forward.1} parent=11 // pred_check
          %p417 = pneg %p286
        $region50: #{fuzzy_mha_forward.1} parent=11 // pred_check_branch
          %419 = sbr.rel (%p417) target = $region52
        $region51: #{fuzzy_mha_forward.1} parent=11 // pred_region
          _
        $region52: #{fuzzy_mha_forward.1} parent=11 // pred_fallthru
          _
        // Predicated region
        $region53: #{fuzzy_mha_forward.1} parent=11 // pred_check
          %p420 = pneg %p307
        $region54: #{fuzzy_mha_forward.1} parent=11 // pred_check_branch
          %422 = sbr.rel (%p420) target = $region56
        $region55: #{fuzzy_mha_forward.1} parent=11 // pred_region
          _
        $region56: #{fuzzy_mha_forward.1} parent=11 // pred_fallthru
          _
        // Predicated region
        $region57: #{fuzzy_mha_forward.1} parent=11 // pred_check
          %p423 = pneg %p328
        $region58: #{fuzzy_mha_forward.1} parent=11 // pred_check_branch
          %425 = sbr.rel (%p423) target = $region60
        $region59: #{fuzzy_mha_forward.1} parent=11 // pred_region
          _
        $region60: #{fuzzy_mha_forward.1} parent=11 // pred_fallthru
          _
        // Predicated region
        $region61: #{fuzzy_mha_forward.1} parent=11 // pred_check
          %p426 = pneg %p349
        $region62: #{fuzzy_mha_forward.1} parent=11 // pred_check_branch
          %428 = sbr.rel (%p426) target = $region64
        $region63: #{fuzzy_mha_forward.1} parent=11 // pred_region
          _
        $region64: #{fuzzy_mha_forward.1} parent=11 // pred_fallthru
          _
      $region12: #{fuzzy_mha_forward.1} parent=5 // pred_fallthru
        _
      %p429 = scmp.lt.s32.totalorder %s24, 2
      // Predicated region
      $region65: #{fuzzy_mha_forward.1} parent=5 // pred_check
        %p430 = pneg %p429
      $region66: #{fuzzy_mha_forward.1} parent=5 // pred_check_branch
        %432 = sbr.rel (%p430) target = $region68
      $region67: #{fuzzy_mha_forward.1} parent=5 // pred_region
        // Predicated region
        $region69: #{fuzzy_mha_forward.1} parent=67 // pred_check
          %p433 = pneg %p44
        $region70: #{fuzzy_mha_forward.1} parent=67 // pred_check_branch
          %435 = sbr.rel (%p433) target = $region72
        $region71: #{fuzzy_mha_forward.1} parent=67 // pred_region
          %p436 = scmp.lt.s32.totalorder %s24, 1
          %s437 = scalar_select %p436, %s24, 1
          %s438 = smul.addr %s437, 8
          %s439 = scalar_lea.vmem %s0, %s438
        $region72: #{fuzzy_mha_forward.1} parent=67 // pred_fallthru
          _
        // Predicated region
        $region73: #{fuzzy_mha_forward.1} parent=67 // pred_check
          %p440 = pneg %p70
        $region74: #{fuzzy_mha_forward.1} parent=67 // pred_check_branch
          %442 = sbr.rel (%p440) target = $region76
        $region75: #{fuzzy_mha_forward.1} parent=67 // pred_region
          %p443 = scmp.lt.s32.totalorder %s24, 1
          %s444 = scalar_select %p443, %s24, 1
          %s445 = smul.addr %s444, 8
          %s446 = scalar_lea.vmem %s1, %s445
        $region76: #{fuzzy_mha_forward.1} parent=67 // pred_fallthru
          _
      $region68: #{fuzzy_mha_forward.1} parent=5 // pred_fallthru
        _
      %p447 = scmp.le.s32.totalorder 1, %s24
      %p448 = scmp.lt.s32.totalorder %s24, 3
      %p449 = pnand %p447, %p448
      %p450 = pneg %p449
      // Predicated region
      $region77: #{fuzzy_mha_forward.1} parent=5 // pred_check
        _
      $region78: #{fuzzy_mha_forward.1} parent=5 // pred_check_branch
        %452 = sbr.rel (%p449) target = $region80
      $region79: #{fuzzy_mha_forward.1} parent=5 // pred_region
        %s453 = ssub.s32 %s24, 1
        %p454 = scmp.lt.s32.totalorder %s29, 1
        %s455 = scalar_select %p454, %s29, 1
        %s456 = smul.addr %s455, 8
        %s457 = scalar_lea.vmem %s0, %s456
        %p458 = pneg %p50
        %p459 = pneg %p47
        %p460 = scmp.lt.s32.totalorder %s29, 1
        %s461 = scalar_select %p460, %s29, 1
        %s462 = smul.addr %s461, 8
        %s463 = scalar_lea.vmem %s1, %s462
        %p464 = pneg %p76
        %p465 = pneg %p73
        %p466 = pneg %p97
        %p467 = pneg %p94
        %p468 = pneg %p118
        %p469 = pneg %p115
        %p470 = pneg %p139
        %p471 = pneg %p136
        %p472 = pneg %p160
        %p473 = pneg %p157
        %p474 = pneg %p181
        %p475 = pneg %p178
        %p476 = pneg %p202
        %p477 = pneg %p199
        %p478 = pneg %p223
        %p479 = pneg %p220
        %p480 = pneg %p244
        %p481 = pneg %p241
        %p482 = pneg %p265
        %p483 = pneg %p262
        %p484 = pneg %p286
        %p485 = pneg %p283
        %p486 = pneg %p307
        %p487 = pneg %p304
        %p488 = pneg %p328
        %p489 = pneg %p325
        %p490 = pneg %p349
        %p491 = pneg %p346
        %p492 = pneg %p375
        %p493 = pneg %p372
        %s494 = sand.u32 %s362, 1
        %s495 = scalar_lea.sflag [#allocation3], %s494
        %s496 = sand.u32 %s362, 1
        %s497 = smul.addr %s496, 8
        %s498 = scalar_lea.vmem [#allocation2], %s497
        %p499 = scmp.lt.s32.totalorder %s29, 1
        %s500 = scalar_select %p499, %s29, 1
        %s501 = smul.addr %s500, 8
        %s502 = scalar_lea.vmem %s0, %s501
        %p503 = scmp.lt.s32.totalorder %s29, 1
        %s504 = scalar_select %p503, %s29, 1
        %s505 = smul.addr %s504, 8
        %s506 = scalar_lea.vmem %s1, %s505
        %v507 = vld [vmem:[%s502] sm:$0xff]
        %v508 = vld [vmem:[%s2] sm:$0xff]
        %v509 = vld [vmem:[%s2 + $0x8] sm:$0xff]
        %v510 = vld [vmem:[%s2 + $0x10] sm:$0xff]
        %v511 = vld [vmem:[%s2 + $0x18] sm:$0xff]
        %v512 = vld [vmem:[%s3] sm:$0x1]
        %v514 = vperm.slane %v512, 0
        %vm516 = vcmask 261120
        %v518 = vsel %vm516, %v507, 0
        %520 = vmatpush.msra.mxu0 0.0
        %521 = vmatpush.msra.mxu0 0.0
        %522 = vmatpush.msra.mxu0 0.0
        %523 = vmatpush.msra.mxu0 0.0
        %524 = vmatpush.msra.mxu0 0.0
        %525 = vmatpush.msra.mxu0 0.0
        %526 = vmatpush.msra.mxu0 0.0
        %527 = vmatpush.msra.mxu0 0.0
        %528 = vmatpush.msra.mxu0 0.0
        %529 = vmatpush.msra.mxu0 0.0
        %530 = vmatpush.msra.mxu0 0.0
        %531 = vmatpush.msra.mxu0 0.0
        %532 = vmatpush.msra.mxu0 %v511
        %533 = vmatpush.msra.mxu0 %v510
        %534 = vmatpush.msra.mxu0 %v509
        %535 = vmatpush.msra.mxu0 %v508
        %536 = vmatmul.f32.gmra.mxu0 %v518
        %v537 = vpop.f32.mrf.mxu0
        %v538 = vadd.f32 %v514, %v537
        %539 = vdwg.mxu0
        %v540 = vld [vmem:[%s506] sm:$0xff]
        %v541 = vld [vmem:[%s4] sm:$0xff]
        %v542 = vld [vmem:[%s4 + $0x8] sm:$0xff]
        %v543 = vld [vmem:[%s4 + $0x10] sm:$0xff]
        %v544 = vld [vmem:[%s4 + $0x18] sm:$0xff]
        %v545 = vld [vmem:[%s5] sm:$0x1]
        %v547 = vperm.slane %v545, 0
        %v550 = vsel %vm516, %v540, 0
        %552 = vmatpush.msra.mxu0 0.0
        %553 = vmatpush.msra.mxu0 0.0
        %554 = vmatpush.msra.mxu0 0.0
        %555 = vmatpush.msra.mxu0 0.0
        %556 = vmatpush.msra.mxu0 0.0
        %557 = vmatpush.msra.mxu0 0.0
        %558 = vmatpush.msra.mxu0 0.0
        %559 = vmatpush.msra.mxu0 0.0
        %560 = vmatpush.msra.mxu0 0.0
        %561 = vmatpush.msra.mxu0 0.0
        %562 = vmatpush.msra.mxu0 0.0
        %563 = vmatpush.msra.mxu0 0.0
        %564 = vmatpush.msra.mxu0 %v544
        %565 = vmatpush.msra.mxu0 %v543
        %566 = vmatpush.msra.mxu0 %v542
        %567 = vmatpush.msra.mxu0 %v541
        %568 = vmatmul.f32.gmra.mxu0 %v550
        %v569 = vpop.f32.mrf.mxu0
        %v570 = vadd.f32 %v547, %v569
        %571 = vdwg.mxu0
        %v572 = vld [vmem:[%s6] sm:$0x1]
        %v574 = vperm.slane %v572, 0
        %v576 = vsub.f32 %v538, %v574
        %v577 = vld [vmem:[%s7] sm:$0x1]
        %v579 = vperm.slane %v577, 0
        %v581 = vmul.f32 %v579, %v576
        %v582 = vmul.f32 %v581, %v576
        %v583 = vld [vmem:[%s8] sm:$0xff]
        %v584 = vld [vmem:[%s8 + $0x8] sm:$0xff]
        %v585 = vld [vmem:[%s8 + $0x10] sm:$0xff]
        %v586 = vld [vmem:[%s8 + $0x18] sm:$0xff]
        %v587 = vld [vmem:[%s8 + $0x20] sm:$0xff]
        %v588 = vld [vmem:[%s8 + $0x28] sm:$0xff]
        %v589 = vld [vmem:[%s8 + $0x30] sm:$0xff]
        %v590 = vld [vmem:[%s8 + $0x38] sm:$0xff]
        %v591 = vld [vmem:[%s8 + $0x40] sm:$0xff]
        %v592 = vld [vmem:[%s8 + $0x48] sm:$0xff]
        %v593 = vld [vmem:[%s8 + $0x50] sm:$0xff]
        %v594 = vld [vmem:[%s8 + $0x58] sm:$0xff]
        %v595 = vld [vmem:[%s8 + $0x60] sm:$0xff]
        %v596 = vld [vmem:[%s8 + $0x68] sm:$0xff]
        %v597 = vld [vmem:[%s8 + $0x70] sm:$0xff]
        %v598 = vld [vmem:[%s8 + $0x78] sm:$0xff]
        %599 = vmatpush.msra.mxu0 %v598
        %600 = vmatpush.msra.mxu0 %v597
        %601 = vmatpush.msra.mxu0 %v596
        %602 = vmatpush.msra.mxu0 %v595
        %603 = vmatpush.msra.mxu0 %v594
        %604 = vmatpush.msra.mxu0 %v593
        %605 = vmatpush.msra.mxu0 %v592
        %606 = vmatpush.msra.mxu0 %v591
        %607 = vmatpush.msra.mxu0 %v590
        %608 = vmatpush.msra.mxu0 %v589
        %609 = vmatpush.msra.mxu0 %v588
        %610 = vmatpush.msra.mxu0 %v587
        %611 = vmatpush.msra.mxu0 %v586
        %612 = vmatpush.msra.mxu0 %v585
        %613 = vmatpush.msra.mxu0 %v584
        %614 = vmatpush.msra.mxu0 %v583
        %615 = vmatmul.f32.gmra.mxu0 %v582
        %v616 = vpop.f32.mrf.mxu0
        %v617 = vadd.f32 0.0, %v616
        %618 = vdwg.mxu0
        %619 = vrot.lane.b32.xlu0 %v617, 32
        %v620 = vpop.permute.xlu0 %619
        %v621 = vmax.f32 %v617, %v620
        %622 = vrot.lane.b32.xlu0 %v617, 64
        %v623 = vpop.permute.xlu0 %622
        %v624 = vmax.f32 %v621, %v623
        %625 = vrot.lane.b32.xlu0 %v617, 96
        %v626 = vpop.permute.xlu0 %625
        %v627 = vmax.f32 %v624, %v626
        %v628 = vsub.f32 %v617, %v627
        %v629 = vmul.f32 %v628, 1.442695
        %v630 = vpow.pop %v629
        %631 = vrot.lane.b32.xlu0 %v630, 32
        %v632 = vpop.permute.xlu0 %631
        %v633 = vadd.f32 %v630, %v632
        %634 = vrot.lane.b32.xlu0 %v630, 64
        %v635 = vpop.permute.xlu0 %634
        %v636 = vadd.f32 %v633, %v635
        %637 = vrot.lane.b32.xlu0 %v630, 96
        %v638 = vpop.permute.xlu0 %637
        %v639 = vadd.f32 %v636, %v638
        %v640 = vrcp.pop %v639
        %v641 = vmul.f32 %v639, %v640
        %v642 = vsub.f32 1.0, %v641
        %v643 = vmul.f32 %v640, %v642
        %v644 = vadd.f32 %v640, %v643
        %vm645 = vweird.f32 %v639
        %vm646 = vweird.f32 %v640
        %vm647 = vmor %vm645, %vm646
        %v648 = vsel %vm647, %v640, %v644
        %v649 = vand.u32 2147483647, %v639
        %vm650 = vcmp.eq.f32.partialorder %v649, 8.507059e+37
        %v651 = vand.u32 %v639, 2147483648
        %v652 = vor.u32 1.1754944e-38, %v651
        %v653 = vsel %vm650, %v652, %v648
        %v654 = vmul.f32 %v630, %v653
        %v655 = vmul.f32 %v654, %v570
        %v656 = vld [vmem:[%s9] sm:$0xff]
        %v657 = vld [vmem:[%s9 + $0x8] sm:$0xff]
        %v658 = vld [vmem:[%s9 + $0x10] sm:$0xff]
        %v659 = vld [vmem:[%s9 + $0x18] sm:$0xff]
        %v660 = vld [vmem:[%s9 + $0x20] sm:$0xff]
        %v661 = vld [vmem:[%s9 + $0x28] sm:$0xff]
        %v662 = vld [vmem:[%s9 + $0x30] sm:$0xff]
        %v663 = vld [vmem:[%s9 + $0x38] sm:$0xff]
        %v664 = vld [vmem:[%s9 + $0x40] sm:$0xff]
        %v665 = vld [vmem:[%s9 + $0x48] sm:$0xff]
        %v666 = vld [vmem:[%s9 + $0x50] sm:$0xff]
        %v667 = vld [vmem:[%s9 + $0x58] sm:$0xff]
        %v668 = vld [vmem:[%s9 + $0x60] sm:$0xff]
        %v669 = vld [vmem:[%s9 + $0x68] sm:$0xff]
        %v670 = vld [vmem:[%s9 + $0x70] sm:$0xff]
        %v671 = vld [vmem:[%s9 + $0x78] sm:$0xff]
        %672 = vmatpush.msra.mxu0 %v671
        %673 = vmatpush.msra.mxu0 %v670
        %674 = vmatpush.msra.mxu0 %v669
        %675 = vmatpush.msra.mxu0 %v668
        %676 = vmatpush.msra.mxu0 %v667
        %677 = vmatpush.msra.mxu0 %v666
        %678 = vmatpush.msra.mxu0 %v665
        %679 = vmatpush.msra.mxu0 %v664
        %680 = vmatpush.msra.mxu0 %v663
        %681 = vmatpush.msra.mxu0 %v662
        %682 = vmatpush.msra.mxu0 %v661
        %683 = vmatpush.msra.mxu0 %v660
        %684 = vmatpush.msra.mxu0 %v659
        %685 = vmatpush.msra.mxu0 %v658
        %686 = vmatpush.msra.mxu0 %v657
        %687 = vmatpush.msra.mxu0 %v656
        %688 = vmatmul.f32.gmra.mxu0 %v655
        %v689 = vpop.f32.mrf.mxu0
        %v690 = vadd.f32 0.0, %v689
        %691 = vdwg.mxu0
        %v692 = vld [vmem:[%s11] sm:$0xff]
        %v693 = vmul.f32 %v690, %v692
        %v694 = vld [vmem:[%s10] sm:$0xff]
        %vm695 = vcmask 64512
        %v697 = vsel %vm695, %v694, 0
        %699 = vmatpush.msra.mxu0 0.0
        %700 = vmatpush.msra.mxu0 0.0
        %701 = vmatpush.msra.mxu0 0.0
        %702 = vmatpush.msra.mxu0 0.0
        %703 = vmatpush.msra.mxu0 0.0
        %704 = vmatpush.msra.mxu0 0.0
        %705 = vmatpush.msra.mxu0 0.0
        %706 = vmatpush.msra.mxu0 0.0
        %707 = vmatpush.msra.mxu0 0.0
        %708 = vmatpush.msra.mxu0 0.0
        %709 = vmatpush.msra.mxu0 0.0
        %710 = vmatpush.msra.mxu0 0.0
        %711 = vmatpush.msra.mxu0 0.0
        %712 = vmatpush.msra.mxu0 0.0
        %713 = vmatpush.msra.mxu0 0.0
        %714 = vmatpush.msra.mxu0 %v693
        %715 = vmatmul.f32.gmra.mxu0 %v697
        %v716 = vpop.f32.mrf.mxu0
        %v717 = vadd.f32 0.0, %v716
        %718 = vdwg.mxu0
        %v719 = vld [vmem:[%s12] sm:$0xff]
        %v720 = vmul.f32 %v717, %v719
        %v721 = vld [vmem:[%s13] sm:$0xff]
        %v722 = vld [vmem:[%s13 + $0x8] sm:$0xff]
        %v723 = vld [vmem:[%s13 + $0x10] sm:$0xff]
        %v724 = vld [vmem:[%s13 + $0x18] sm:$0xff]
        %v725 = vld [vmem:[%s13 + $0x20] sm:$0xff]
        %v726 = vld [vmem:[%s13 + $0x28] sm:$0xff]
        %v727 = vld [vmem:[%s13 + $0x30] sm:$0xff]
        %v728 = vld [vmem:[%s13 + $0x38] sm:$0xff]
        %v729 = vld [vmem:[%s13 + $0x40] sm:$0xff]
        %v730 = vld [vmem:[%s13 + $0x48] sm:$0xff]
        %v731 = vld [vmem:[%s13 + $0x50] sm:$0xff]
        %v732 = vld [vmem:[%s13 + $0x58] sm:$0xff]
        %v733 = vld [vmem:[%s13 + $0x60] sm:$0xff]
        %v734 = vld [vmem:[%s13 + $0x68] sm:$0xff]
        %v735 = vld [vmem:[%s13 + $0x70] sm:$0xff]
        %v736 = vld [vmem:[%s13 + $0x78] sm:$0xff]
        %v737 = vld [vmem:[%s14] sm:$0x1]
        %v739 = vperm.slane %v737, 0
        %741 = vmatpush.msra.mxu0 %v736
        %742 = vmatpush.msra.mxu0 %v735
        %743 = vmatpush.msra.mxu0 %v734
        %744 = vmatpush.msra.mxu0 %v733
        %745 = vmatpush.msra.mxu0 %v732
        %746 = vmatpush.msra.mxu0 %v731
        %747 = vmatpush.msra.mxu0 %v730
        %748 = vmatpush.msra.mxu0 %v729
        %749 = vmatpush.msra.mxu0 %v728
        %750 = vmatpush.msra.mxu0 %v727
        %751 = vmatpush.msra.mxu0 %v726
        %752 = vmatpush.msra.mxu0 %v725
        %753 = vmatpush.msra.mxu0 %v724
        %754 = vmatpush.msra.mxu0 %v723
        %755 = vmatpush.msra.mxu0 %v722
        %756 = vmatpush.msra.mxu0 %v721
        %757 = vmatmul.f32.gmra.mxu0 %v720
        %v758 = vpop.f32.mrf.mxu0
        %v759 = vadd.f32 %v739, %v758
        %760 = vdwg.mxu0
        %761 = vst.msk [vmem:[%s498] sm:$0xff] %vm516, %v759
        %s762 = sand.u32 %s362, 1
        %s763 = scalar_lea.sflag [#allocation3], %s762
        %s764 = sand.u32 %s362, 1
        %s765 = smul.addr %s764, 8
        %s766 = scalar_lea.vmem [#allocation2], %s765
        // Predicated region
        $region81: #{fuzzy_mha_forward.1} parent=79 // pred_check
          %p767 = pneg %p372
        $region82: #{fuzzy_mha_forward.1} parent=79 // pred_check_branch
          %769 = sbr.rel (%p767) target = $region84
        $region83: #{fuzzy_mha_forward.1} parent=79 // pred_region
          %771 = vsyncadd %s763, 0
          %s772 = smul.addr %s29, 8
          %s773 = scalar_lea.hbm %s15, %s772
          %s775 = sshll.u32 %s766, 4
          %s776 = int_to_ptr.vmem [resolvable:$true] %s775
          %s777 = sshll.u32 %s773, 4
          %s778 = int_to_ptr.hbm [resolvable:$true] %s777
          %780 = dma.vmem_to_hbm [thread:$0]  %s776, 128, %s778, %s763
        $region84: #{fuzzy_mha_forward.1} parent=79 // pred_fallthru
          _
      $region80: #{fuzzy_mha_forward.1} parent=5 // pred_fallthru
        _
      %p781 = scmp.le.s32.totalorder 2, %s24
      // Predicated region
      $region85: #{fuzzy_mha_forward.1} parent=5 // pred_check
        %p782 = pneg %p781
      $region86: #{fuzzy_mha_forward.1} parent=5 // pred_check_branch
        %784 = sbr.rel (%p782) target = $region88
      $region87: #{fuzzy_mha_forward.1} parent=5 // pred_region
        %s785 = ssub.s32 %s24, 2
        // Predicated region
        $region89: #{fuzzy_mha_forward.1} parent=87 // pred_check
          %p786 = pneg %p378
        $region90: #{fuzzy_mha_forward.1} parent=87 // pred_check_branch
          %788 = sbr.rel (%p786) target = $region92
        $region91: #{fuzzy_mha_forward.1} parent=87 // pred_region
          %s789 = sand.u32 %s363, 1
          %s790 = scalar_lea.sflag [#allocation3], %s789
          %s791 = sand.u32 %s363, 1
          %s792 = smul.addr %s791, 8
          %s793 = scalar_lea.vmem [#allocation2], %s792
          %795 = dma.done %s790, 128
        $region92: #{fuzzy_mha_forward.1} parent=87 // pred_fallthru
          _
      $region88: #{fuzzy_mha_forward.1} parent=5 // pred_fallthru
        _
    $region6: #{fuzzy_mha_forward.1} parent=1 // loop_footer
      %s28 = sadd.s32 1, %s24
    $region7: #{fuzzy_mha_forward.1} parent=1 // loop_footer_branch
      %23 = sbr.rel target = $region3
    $region8: #{fuzzy_mha_forward.1} parent=1 // loop_exit
      _
    %796 = vsyncpa [#allocation3], 1
    %s797 = scalar_lea.sflag [#allocation3], 1
    %798 = vsyncpa %s797, 1

</llo_original>
